<compile_context>
chip_gen: v7x
topology: tpu7x:2x2x1
jax: 0.10.0
libtpu: 0.0.40
codegen_flags: <defaults>
</compile_context>

<pallas_src>
import jax
import jax.numpy as jnp
from jax.experimental import pallas as pl
from jax.experimental.pallas import tpu as pltpu

INPUT_SIZE = 63
K_PAD = 64                       # contraction dim padded 63 -> 64
HIDDEN_SIZE = 128
ROT_SIZE = 6
LOC_SIZE = 3
HEAD_SIZE = ROT_SIZE + LOC_SIZE  # fused rot|loc head -> 9


def gpose_kernel(x_ref,
                 w1_ref, b1_ref,
                 w2_ref, b2_ref,
                 w3_ref, b3_ref,
                 w4_ref, b4_ref,
                 wh_ref, bh_ref,
                 out_ref):
    """One batch tile: 4x (matmul + bias + ReLU), then fused 128->9 head."""
    cdt = w1_ref.dtype  # compute dtype (bf16) for MXU feeds

    h = jnp.dot(x_ref[...], w1_ref[...], preferred_element_type=jnp.float32)
    h = jnp.maximum(h + b1_ref[...], 0.0)           # bias + ReLU in f32

    h = jnp.dot(h.astype(cdt), w2_ref[...], preferred_element_type=jnp.float32)
    h = jnp.maximum(h + b2_ref[...], 0.0)

    h = jnp.dot(h.astype(cdt), w3_ref[...], preferred_element_type=jnp.float32)
    h = jnp.maximum(h + b3_ref[...], 0.0)

    h = jnp.dot(h.astype(cdt), w4_ref[...], preferred_element_type=jnp.float32)
    h = jnp.maximum(h + b4_ref[...], 0.0)

    out = jnp.dot(h.astype(cdt), wh_ref[...], preferred_element_type=jnp.float32)
    out_ref[...] = (out + bh_ref[...]).astype(out_ref.dtype)


def _pick_tile_b(batch):
    """Batch tile: >=256 keeps v6e/v7x's 256x256 MXU fed (128 is already enough
    for v5e's 128x128 MXU); small batches just round up to the 8-row sublane
    granule so the (8,128) block rule holds."""
    if batch >= 256:
        return 256
    return max(8, ((batch + 7) // 8) * 8)


def gpose_forward(x, params, *, tile_b=None, compute_dtype=jnp.bfloat16):
    """x: [B, 63] float32 -> (rot [B, 6], loc [B, 3]) float32."""
    B = x.shape[0]
    (w1, b1, w2, b2, w3, b3, w4, b4, wr, br, wl, bl) = params

    tb = _pick_tile_b(B) if tile_b is None else tile_b
    b_pad = ((B + tb - 1) // tb) * tb

    # Host-side prep: zero-pad K 63->64 and batch to a tile multiple, fuse the
    # two head weights/biases, and cast matmul operands to bf16.
    xp = jnp.zeros((b_pad, K_PAD), compute_dtype)
    xp = xp.at[:B, :INPUT_SIZE].set(x.astype(compute_dtype))
    w1p = jnp.zeros((K_PAD, HIDDEN_SIZE), compute_dtype)
    w1p = w1p.at[:INPUT_SIZE, :].set(w1.astype(compute_dtype))
    wh = jnp.concatenate([wr, wl], axis=1).astype(compute_dtype)  # [128, 9]
    bh = jnp.concatenate([br, bl], axis=1).astype(jnp.float32)    # [1, 9]

    w2c, w3c, w4c = (w.astype(compute_dtype) for w in (w2, w3, w4))
    b1c, b2c, b3c, b4c = (b.astype(jnp.float32) for b in (b1, b2, b3, b4))

    # Weights/biases: full-extent blocks, constant index -> stay VMEM-resident.
    full = lambda a: pl.BlockSpec(a.shape, lambda i: (0,) * a.ndim)

    out = pl.pallas_call(
        gpose_kernel,
        out_shape=jax.ShapeDtypeStruct((b_pad, HEAD_SIZE), jnp.float32),
        grid=(b_pad // tb,),
        in_specs=[
            pl.BlockSpec((tb, K_PAD), lambda i: (i, 0)),   # batch-tiled input
            full(w1p), full(b1c),
            full(w2c), full(b2c),
            full(w3c), full(b3c),
            full(w4c), full(b4c),
            full(wh), full(bh),
        ],
        out_specs=pl.BlockSpec((tb, HEAD_SIZE), lambda i: (i, 0)),
        compiler_params=pltpu.CompilerParams(
            dimension_semantics=("parallel",)),
    )(xp, w1p, b1c, w2c, b2c, w3c, b3c, w4c, b4c, wh, bh)

    rot = out[:B, :ROT_SIZE]
    loc = out[:B, ROT_SIZE:]
    return rot, loc


def init_params(key):
    """Deterministic init mimicking nn.Linear's U(-1/sqrt(fan_in), 1/sqrt(fan_in)).

    Weights are stored [in, out] (transposed vs PyTorch) and biases [1, out]."""
    def linear(k, fan_in, fan_out):
        kw, kb = jax.random.split(k)
        bound = 1.0 / jnp.sqrt(jnp.float32(fan_in))
        w = jax.random.uniform(kw, (fan_in, fan_out), jnp.float32, -bound, bound)
        b = jax.random.uniform(kb, (1, fan_out), jnp.float32, -bound, bound)
        return w, b

    keys = jax.random.split(key, 6)
    w1, b1 = linear(keys[0], INPUT_SIZE, HIDDEN_SIZE)
    w2, b2 = linear(keys[1], HIDDEN_SIZE, HIDDEN_SIZE)
    w3, b3 = linear(keys[2], HIDDEN_SIZE, HIDDEN_SIZE)
    w4, b4 = linear(keys[3], HIDDEN_SIZE, HIDDEN_SIZE)
    wr, br = linear(keys[4], HIDDEN_SIZE, ROT_SIZE)
    wl, bl = linear(keys[5], HIDDEN_SIZE, LOC_SIZE)
    return (w1, b1, w2, b2, w3, b3, w4, b4, wr, br, wl, bl)


def gpose_ref(x, params, compute_dtype=jnp.bfloat16):
    """Pure-JAX reference mirroring the kernel's precision choices
    (bf16 matmul operands, f32 accumulation, f32 bias/ReLU)."""
    (w1, b1, w2, b2, w3, b3, w4, b4, wr, br, wl, bl) = params
    c = lambda a: a.astype(compute_dtype)
    dot = lambda a, w: jnp.dot(c(a), c(w), preferred_element_type=jnp.float32)
    h = jnp.maximum(dot(x, w1) + b1, 0.0)
    h = jnp.maximum(dot(h, w2) + b2, 0.0)
    h = jnp.maximum(dot(h, w3) + b3, 0.0)
    h = jnp.maximum(dot(h, w4) + b4, 0.0)
    return dot(h, wr) + br, dot(h, wl) + bl


if __name__ == "__main__":
    key = jax.random.PRNGKey(0)
    kx, kp = jax.random.split(key)

    B = 20  # non-multiple of the batch tile to exercise the pad/slice path
    x = jax.random.normal(kx, (B, INPUT_SIZE), jnp.float32)
    params = init_params(kp)

    # tile_b=8 -> 3 grid steps: exercises the pipelined, gridded path at small B.
    rot, loc = gpose_forward(x, params, tile_b=8)
    rot, loc = jax.block_until_ready((rot, loc))

    rot_ref, loc_ref = gpose_ref(x, params)
    assert rot.shape == (B, ROT_SIZE) and loc.shape == (B, LOC_SIZE)
    assert jnp.allclose(rot, rot_ref, atol=1e-3, rtol=1e-3), \
        float(jnp.max(jnp.abs(rot - rot_ref)))
    assert jnp.allclose(loc, loc_ref, atol=1e-3, rtol=1e-3), \
        float(jnp.max(jnp.abs(loc - loc_ref)))

    print("KERNEL_OK")
</pallas_src>

<mosaic_0001>
module attributes {stable_mosaic.version = 11 : i64} {
  func.func @gpose_kernel(%arg0: i32, %arg1: memref<8x64xbf16, #tpu.memory_space<vmem>>, %arg2: memref<64x128xbf16, #tpu.memory_space<vmem>>, %arg3: memref<1x128xf32, #tpu.memory_space<vmem>>, %arg4: memref<128x128xbf16, #tpu.memory_space<vmem>>, %arg5: memref<1x128xf32, #tpu.memory_space<vmem>>, %arg6: memref<128x128xbf16, #tpu.memory_space<vmem>>, %arg7: memref<1x128xf32, #tpu.memory_space<vmem>>, %arg8: memref<128x128xbf16, #tpu.memory_space<vmem>>, %arg9: memref<1x128xf32, #tpu.memory_space<vmem>>, %arg10: memref<128x9xbf16, #tpu.memory_space<vmem>>, %arg11: memref<1x9xf32, #tpu.memory_space<vmem>>, %arg12: memref<8x9xf32, #tpu.memory_space<vmem>>) attributes {dimension_semantics = [#tpu.dimension_semantics<parallel>], iteration_bounds = array<i64: 3>, scalar_prefetch = 0 : i64, scratch_operands = 0 : i64, tpu.core_type = #tpu.core_type<tc>, window_params = [{transform_indices = @transform_0, window_bounds = array<i64: 8, 64>}, {pipeline_mode = #tpu.pipeline_mode<synchronous>, transform_indices = @transform_1, window_bounds = array<i64: 64, 128>}, {pipeline_mode = #tpu.pipeline_mode<synchronous>, transform_indices = @transform_2, window_bounds = array<i64: 1, 128>}, {pipeline_mode = #tpu.pipeline_mode<synchronous>, transform_indices = @transform_3, window_bounds = array<i64: 128, 128>}, {pipeline_mode = #tpu.pipeline_mode<synchronous>, transform_indices = @transform_4, window_bounds = array<i64: 1, 128>}, {pipeline_mode = #tpu.pipeline_mode<synchronous>, transform_indices = @transform_5, window_bounds = array<i64: 128, 128>}, {pipeline_mode = #tpu.pipeline_mode<synchronous>, transform_indices = @transform_6, window_bounds = array<i64: 1, 128>}, {pipeline_mode = #tpu.pipeline_mode<synchronous>, transform_indices = @transform_7, window_bounds = array<i64: 128, 128>}, {pipeline_mode = #tpu.pipeline_mode<synchronous>, transform_indices = @transform_8, window_bounds = array<i64: 1, 128>}, {pipeline_mode = #tpu.pipeline_mode<synchronous>, transform_indices = @transform_9, window_bounds = array<i64: 128, 9>}, {pipeline_mode = #tpu.pipeline_mode<synchronous>, transform_indices = @transform_10, window_bounds = array<i64: 1, 9>}, {transform_indices = @transform_11, window_bounds = array<i64: 8, 9>}]} {
    %c0 = arith.constant 0 : index
    %c0_0 = arith.constant 0 : index
    %0 = vector.load %arg1[%c0, %c0_0] : memref<8x64xbf16, #tpu.memory_space<vmem>>, vector<8x64xbf16>
    %c0_1 = arith.constant 0 : index
    %c0_2 = arith.constant 0 : index
    %1 = vector.load %arg2[%c0_1, %c0_2] : memref<64x128xbf16, #tpu.memory_space<vmem>>, vector<64x128xbf16>
    %cst = arith.constant dense<0.000000e+00> : vector<8x128xf32>
    %2 = tpu.matmul %0, %1, %cst {dimension_numbers = #tpu.dot_dimension_numbers<[1], [0], [0], [1], [0, 0, 1, 1], [], []>} : vector<8x64xbf16>, vector<64x128xbf16>, vector<8x128xf32> -> vector<8x128xf32>
    %c0_3 = arith.constant 0 : index
    %c0_4 = arith.constant 0 : index
    %3 = vector.load %arg3[%c0_3, %c0_4] : memref<1x128xf32, #tpu.memory_space<vmem>>, vector<1x128xf32>
    %4 = vector.broadcast %3 : vector<1x128xf32> to vector<8x128xf32>
    %5 = arith.addf %2, %4 : vector<8x128xf32>
    %cst_5 = arith.constant 0.000000e+00 : f32
    %6 = vector.broadcast %cst_5 : f32 to vector<8x128xf32>
    %7 = arith.maximumf %5, %6 : vector<8x128xf32>
    %8 = arith.truncf %7 : vector<8x128xf32> to vector<8x128xbf16>
    %c0_6 = arith.constant 0 : index
    %c0_7 = arith.constant 0 : index
    %9 = vector.load %arg4[%c0_6, %c0_7] : memref<128x128xbf16, #tpu.memory_space<vmem>>, vector<128x128xbf16>
    %cst_8 = arith.constant dense<0.000000e+00> : vector<8x128xf32>
    %10 = tpu.matmul %8, %9, %cst_8 {dimension_numbers = #tpu.dot_dimension_numbers<[1], [0], [0], [1], [0, 0, 1, 1], [], []>} : vector<8x128xbf16>, vector<128x128xbf16>, vector<8x128xf32> -> vector<8x128xf32>
    %c0_9 = arith.constant 0 : index
    %c0_10 = arith.constant 0 : index
    %11 = vector.load %arg5[%c0_9, %c0_10] : memref<1x128xf32, #tpu.memory_space<vmem>>, vector<1x128xf32>
    %12 = vector.broadcast %11 : vector<1x128xf32> to vector<8x128xf32>
    %13 = arith.addf %10, %12 : vector<8x128xf32>
    %cst_11 = arith.constant 0.000000e+00 : f32
    %14 = vector.broadcast %cst_11 : f32 to vector<8x128xf32>
    %15 = arith.maximumf %13, %14 : vector<8x128xf32>
    %16 = arith.truncf %15 : vector<8x128xf32> to vector<8x128xbf16>
    %c0_12 = arith.constant 0 : index
    %c0_13 = arith.constant 0 : index
    %17 = vector.load %arg6[%c0_12, %c0_13] : memref<128x128xbf16, #tpu.memory_space<vmem>>, vector<128x128xbf16>
    %cst_14 = arith.constant dense<0.000000e+00> : vector<8x128xf32>
    %18 = tpu.matmul %16, %17, %cst_14 {dimension_numbers = #tpu.dot_dimension_numbers<[1], [0], [0], [1], [0, 0, 1, 1], [], []>} : vector<8x128xbf16>, vector<128x128xbf16>, vector<8x128xf32> -> vector<8x128xf32>
    %c0_15 = arith.constant 0 : index
    %c0_16 = arith.constant 0 : index
    %19 = vector.load %arg7[%c0_15, %c0_16] : memref<1x128xf32, #tpu.memory_space<vmem>>, vector<1x128xf32>
    %20 = vector.broadcast %19 : vector<1x128xf32> to vector<8x128xf32>
    %21 = arith.addf %18, %20 : vector<8x128xf32>
    %cst_17 = arith.constant 0.000000e+00 : f32
    %22 = vector.broadcast %cst_17 : f32 to vector<8x128xf32>
    %23 = arith.maximumf %21, %22 : vector<8x128xf32>
    %24 = arith.truncf %23 : vector<8x128xf32> to vector<8x128xbf16>
    %c0_18 = arith.constant 0 : index
    %c0_19 = arith.constant 0 : index
    %25 = vector.load %arg8[%c0_18, %c0_19] : memref<128x128xbf16, #tpu.memory_space<vmem>>, vector<128x128xbf16>
    %cst_20 = arith.constant dense<0.000000e+00> : vector<8x128xf32>
    %26 = tpu.matmul %24, %25, %cst_20 {dimension_numbers = #tpu.dot_dimension_numbers<[1], [0], [0], [1], [0, 0, 1, 1], [], []>} : vector<8x128xbf16>, vector<128x128xbf16>, vector<8x128xf32> -> vector<8x128xf32>
    %c0_21 = arith.constant 0 : index
    %c0_22 = arith.constant 0 : index
    %27 = vector.load %arg9[%c0_21, %c0_22] : memref<1x128xf32, #tpu.memory_space<vmem>>, vector<1x128xf32>
    %28 = vector.broadcast %27 : vector<1x128xf32> to vector<8x128xf32>
    %29 = arith.addf %26, %28 : vector<8x128xf32>
    %cst_23 = arith.constant 0.000000e+00 : f32
    %30 = vector.broadcast %cst_23 : f32 to vector<8x128xf32>
    %31 = arith.maximumf %29, %30 : vector<8x128xf32>
    %32 = arith.truncf %31 : vector<8x128xf32> to vector<8x128xbf16>
    %c0_24 = arith.constant 0 : index
    %c0_25 = arith.constant 0 : index
    %33 = vector.load %arg10[%c0_24, %c0_25] : memref<128x9xbf16, #tpu.memory_space<vmem>>, vector<128x9xbf16>
    %cst_26 = arith.constant dense<0.000000e+00> : vector<8x9xf32>
    %34 = tpu.matmul %32, %33, %cst_26 {dimension_numbers = #tpu.dot_dimension_numbers<[1], [0], [0], [1], [0, 0, 1, 1], [], []>} : vector<8x128xbf16>, vector<128x9xbf16>, vector<8x9xf32> -> vector<8x9xf32>
    %c0_27 = arith.constant 0 : index
    %c0_28 = arith.constant 0 : index
    %35 = vector.load %arg11[%c0_27, %c0_28] : memref<1x9xf32, #tpu.memory_space<vmem>>, vector<1x9xf32>
    %36 = vector.broadcast %35 : vector<1x9xf32> to vector<8x9xf32>
    %37 = arith.addf %34, %36 : vector<8x9xf32>
    %c0_29 = arith.constant 0 : index
    %c0_30 = arith.constant 0 : index
    %38 = vector.load %arg12[%c0_29, %c0_30] : memref<8x9xf32, #tpu.memory_space<vmem>>, vector<8x9xf32>
    tpu.vector_store %arg12[%c0_29, %c0_30], %37 {strides = array<i32>} : memref<8x9xf32, #tpu.memory_space<vmem>>, vector<8x9xf32>,
    return
  }
  func.func @transform_0(%arg0: i32) -> (i32, i32) {
    %c0_i32 = arith.constant 0 : i32
    %c0_i32_0 = arith.constant 0 : i32
    return %arg0, %c0_i32 : i32, i32
  }
  func.func @transform_1(%arg0: i32) -> (i32, i32) {
    %c0_i32 = arith.constant 0 : i32
    %c0_i32_0 = arith.constant 0 : i32
    %c0_i32_1 = arith.constant 0 : i32
    return %c0_i32, %c0_i32_0 : i32, i32
  }
  func.func @transform_2(%arg0: i32) -> (i32, i32) {
    %c0_i32 = arith.constant 0 : i32
    %c0_i32_0 = arith.constant 0 : i32
    %c0_i32_1 = arith.constant 0 : i32
    return %c0_i32, %c0_i32_0 : i32, i32
  }
  func.func @transform_3(%arg0: i32) -> (i32, i32) {
    %c0_i32 = arith.constant 0 : i32
    %c0_i32_0 = arith.constant 0 : i32
    %c0_i32_1 = arith.constant 0 : i32
    return %c0_i32, %c0_i32_0 : i32, i32
  }
  func.func @transform_4(%arg0: i32) -> (i32, i32) {
    %c0_i32 = arith.constant 0 : i32
    %c0_i32_0 = arith.constant 0 : i32
    %c0_i32_1 = arith.constant 0 : i32
    return %c0_i32, %c0_i32_0 : i32, i32
  }
  func.func @transform_5(%arg0: i32) -> (i32, i32) {
    %c0_i32 = arith.constant 0 : i32
    %c0_i32_0 = arith.constant 0 : i32
    %c0_i32_1 = arith.constant 0 : i32
    return %c0_i32, %c0_i32_0 : i32, i32
  }
  func.func @transform_6(%arg0: i32) -> (i32, i32) {
    %c0_i32 = arith.constant 0 : i32
    %c0_i32_0 = arith.constant 0 : i32
    %c0_i32_1 = arith.constant 0 : i32
    return %c0_i32, %c0_i32_0 : i32, i32
  }
  func.func @transform_7(%arg0: i32) -> (i32, i32) {
    %c0_i32 = arith.constant 0 : i32
    %c0_i32_0 = arith.constant 0 : i32
    %c0_i32_1 = arith.constant 0 : i32
    return %c0_i32, %c0_i32_0 : i32, i32
  }
  func.func @transform_8(%arg0: i32) -> (i32, i32) {
    %c0_i32 = arith.constant 0 : i32
    %c0_i32_0 = arith.constant 0 : i32
    %c0_i32_1 = arith.constant 0 : i32
    return %c0_i32, %c0_i32_0 : i32, i32
  }
  func.func @transform_9(%arg0: i32) -> (i32, i32) {
    %c0_i32 = arith.constant 0 : i32
    %c0_i32_0 = arith.constant 0 : i32
    %c0_i32_1 = arith.constant 0 : i32
    return %c0_i32, %c0_i32_0 : i32, i32
  }
  func.func @transform_10(%arg0: i32) -> (i32, i32) {
    %c0_i32 = arith.constant 0 : i32
    %c0_i32_0 = arith.constant 0 : i32
    %c0_i32_1 = arith.constant 0 : i32
    return %c0_i32, %c0_i32_0 : i32, i32
  }
  func.func @transform_11(%arg0: i32) -> (i32, i32) {
    %c0_i32 = arith.constant 0 : i32
    %c0_i32_0 = arith.constant 0 : i32
    return %arg0, %c0_i32 : i32, i32
  }
}

</mosaic_0001>

<llo_original>
// kernel: tpu_custom_call.1
$region0: #{tpu_custom_call.1}
  #allocation0 [shape = 'u32[]', space=smem, size = 0x4, offset = 0x4, fixed_abs, tag = 'smem constant byte address 0x4 - core index']
  #allocation1 [shape = 'u32[144,128]{1,0:T(1,128)}', space=vmem, size = 0x12000, scoped, tag = 'internal scratch']
  %s0 = inlined_call_operand.vmem [shape: bf16[24,64], index: 0, kind: input, shape index: {}]
  %s1 = inlined_call_operand.hbm [shape: bf16[64,128], index: 1, kind: input, shape index: {}]
  %s2 = inlined_call_operand.vmem [shape: f32[1,128], index: 2, kind: input, shape index: {}]
  %s3 = inlined_call_operand.vmem [shape: bf16[128,128], index: 3, kind: input, shape index: {}]
  %s4 = inlined_call_operand.vmem [shape: f32[1,128], index: 4, kind: input, shape index: {}]
  %s5 = inlined_call_operand.hbm [shape: bf16[128,128], index: 5, kind: input, shape index: {}]
  %s6 = inlined_call_operand.vmem [shape: f32[1,128], index: 6, kind: input, shape index: {}]
  %s7 = inlined_call_operand.hbm [shape: bf16[128,128], index: 7, kind: input, shape index: {}]
  %s8 = inlined_call_operand.vmem [shape: f32[1,128], index: 8, kind: input, shape index: {}]
  %s9 = inlined_call_operand.vmem [shape: bf16[128,9], index: 9, kind: input, shape index: {}]
  %s10 = inlined_call_operand.vmem [shape: f32[1,9], index: 10, kind: input, shape index: {}]
  %s11 = inlined_call_operand.vmem [shape: f32[24,9], index: 11, kind: output, shape index: {}]
  %s12 = sld [smem:[#allocation0]]
  $region89: #{tpu_custom_call.1} parent=0
    _
  %s14 = ssub.s32 1, %s12
  %s15 = scalar_select 0, %s14, %s12
  $region1: #{tpu_custom_call.1} parent=0
    #allocation2 [shape = 'u8[16384]{0}', space=vmem, size = 0x4000, scoped, tag = 'input window, operand 1, single buffered']
    #allocation3 [shape = 's32[2]{0}', space=sflag, size = 0x8, scoped, tag = 'scoped memory for tpu_custom_call.1']
    #allocation4 [shape = 'u8[32768]{0}', space=vmem, size = 0x8000, scoped, tag = 'input window, operand 5, single buffered']
    #allocation5 [shape = 's32[1]{0}', space=sflag, size = 0x4, scoped, tag = 'scoped memory for tpu_custom_call.1']
    #allocation6 [shape = 'u8[32768]{0}', space=vmem, size = 0x8000, scoped, tag = 'input window, operand 7, single buffered']
    %16 = vsyncpa [#allocation3], 0
    %17 = vsyncpa [#allocation5], 0
    loop: start=0, step=1, limit=5
    $region2: #{tpu_custom_call.1} parent=1 // loop_pre_header
      _
    $region3: #{tpu_custom_call.1} parent=1 // loop_header
      %s19 = sphi 0, %s23
      %p20 = scmp.ge.s32.totalorder %s19, 5
      %s29 = sphi 0, %s31
      %s32 = sphi 0, %s29
      %s33 = sphi 0, %s32
      %s49 = sphi 0, %s33
      %s53 = sphi 0, %s53
      %s55 = sphi 0, %s53
      %s56 = sphi 0, %s55
      %s70 = sphi 0, %s56
      %s74 = sphi 0, %s74
      %s76 = sphi 0, %s74
      %s77 = sphi 0, %s76
      %s91 = sphi 0, %s77
      %s95 = sphi 0, %s95
      %s97 = sphi 0, %s95
      %s98 = sphi 0, %s97
      %s112 = sphi 0, %s98
      %s116 = sphi 0, %s116
      %s118 = sphi 0, %s116
      %s119 = sphi 0, %s118
      %s133 = sphi 0, %s119
      %s137 = sphi 0, %s137
      %s139 = sphi 0, %s137
      %s140 = sphi 0, %s139
      %s154 = sphi 0, %s140
      %s158 = sphi 0, %s158
      %s160 = sphi 0, %s158
      %s161 = sphi 0, %s160
      %s175 = sphi 0, %s161
      %s179 = sphi 0, %s179
      %s181 = sphi 0, %s179
      %s182 = sphi 0, %s181
      %s196 = sphi 0, %s182
      %s200 = sphi 0, %s200
      %s202 = sphi 0, %s200
      %s203 = sphi 0, %s202
      %s217 = sphi 0, %s203
      %s221 = sphi 0, %s221
      %s223 = sphi 0, %s221
      %s224 = sphi 0, %s223
      %s238 = sphi 0, %s224
      %s242 = sphi 0, %s242
      %s244 = sphi 0, %s242
      %s245 = sphi 0, %s244
      %s259 = sphi 0, %s245
      %s265 = sphi 0, %s267
      %s268 = sphi 0, %s265
      %s269 = sphi 0, %s268
      %s285 = sphi 0, %s269
    $region4: #{tpu_custom_call.1} parent=1 // loop_header_branch
      %22 = sbr.rel (%p20) target = $region8
    $region5: #{tpu_custom_call.1} parent=1 // loop_body
      %s24 = ssub.s32 %s19, 1
      %s25 = ssub.s32 %s19, 2
      %s26 = sadd.s32 %s19, 1
      %s27 = ssub.s32 %s19, %s26
      %p28 = scmp.eq.s32.totalorder %s27, 0
      %s30 = sadd.s32 %s29, 1
      %s31 = scalar_select %p28, %s29, %s30
      %p34 = pneg %p28
      %p35 = scmp.eq.s32.totalorder %s19, 2
      %p36 = por %p34, %p35
      %p37 = scmp.ne.s32.totalorder %s29, %s32
      %p38 = scmp.eq.s32.totalorder %s19, 0
      %p39 = por %p37, %p38
      %p40 = scmp.ne.s32.totalorder %s29, %s32
      %p41 = scmp.eq.s32.totalorder %s24, 2
      %p42 = por %p40, %p41
      %p43 = scmp.ne.s32.totalorder %s32, %s33
      %p44 = scmp.eq.s32.totalorder %s24, 0
      %p45 = por %p43, %p44
      %p46 = scmp.ne.s32.totalorder %s32, %s33
      %p47 = scmp.eq.s32.totalorder %s25, 2
      %p48 = por %p46, %p47
      %p50 = scmp.ne.s32.totalorder %s33, %s49
      %p51 = scmp.eq.s32.totalorder %s25, 0
      %p52 = por %p50, %p51
      %s54 = sadd.s32 %s53, 1
      %p57 = scmp.eq.s32.totalorder %s19, 2
      %p58 = scmp.ne.s32.totalorder %s53, %s55
      %p59 = scmp.eq.s32.totalorder %s19, 0
      %p60 = por %p58, %p59
      %p61 = scmp.ne.s32.totalorder %s53, %s55
      %p62 = scmp.eq.s32.totalorder %s24, 2
      %p63 = por %p61, %p62
      %p64 = scmp.ne.s32.totalorder %s55, %s56
      %p65 = scmp.eq.s32.totalorder %s24, 0
      %p66 = por %p64, %p65
      %p67 = scmp.ne.s32.totalorder %s55, %s56
      %p68 = scmp.eq.s32.totalorder %s25, 2
      %p69 = por %p67, %p68
      %p71 = scmp.ne.s32.totalorder %s56, %s70
      %p72 = scmp.eq.s32.totalorder %s25, 0
      %p73 = por %p71, %p72
      %s75 = sadd.s32 %s74, 1
      %p78 = scmp.eq.s32.totalorder %s19, 2
      %p79 = scmp.ne.s32.totalorder %s74, %s76
      %p80 = scmp.eq.s32.totalorder %s19, 0
      %p81 = por %p79, %p80
      %p82 = scmp.ne.s32.totalorder %s74, %s76
      %p83 = scmp.eq.s32.totalorder %s24, 2
      %p84 = por %p82, %p83
      %p85 = scmp.ne.s32.totalorder %s76, %s77
      %p86 = scmp.eq.s32.totalorder %s24, 0
      %p87 = por %p85, %p86
      %p88 = scmp.ne.s32.totalorder %s76, %s77
      %p89 = scmp.eq.s32.totalorder %s25, 2
      %p90 = por %p88, %p89
      %p92 = scmp.ne.s32.totalorder %s77, %s91
      %p93 = scmp.eq.s32.totalorder %s25, 0
      %p94 = por %p92, %p93
      %s96 = sadd.s32 %s95, 1
      %p99 = scmp.eq.s32.totalorder %s19, 2
      %p100 = scmp.ne.s32.totalorder %s95, %s97
      %p101 = scmp.eq.s32.totalorder %s19, 0
      %p102 = por %p100, %p101
      %p103 = scmp.ne.s32.totalorder %s95, %s97
      %p104 = scmp.eq.s32.totalorder %s24, 2
      %p105 = por %p103, %p104
      %p106 = scmp.ne.s32.totalorder %s97, %s98
      %p107 = scmp.eq.s32.totalorder %s24, 0
      %p108 = por %p106, %p107
      %p109 = scmp.ne.s32.totalorder %s97, %s98
      %p110 = scmp.eq.s32.totalorder %s25, 2
      %p111 = por %p109, %p110
      %p113 = scmp.ne.s32.totalorder %s98, %s112
      %p114 = scmp.eq.s32.totalorder %s25, 0
      %p115 = por %p113, %p114
      %s117 = sadd.s32 %s116, 1
      %p120 = scmp.eq.s32.totalorder %s19, 2
      %p121 = scmp.ne.s32.totalorder %s116, %s118
      %p122 = scmp.eq.s32.totalorder %s19, 0
      %p123 = por %p121, %p122
      %p124 = scmp.ne.s32.totalorder %s116, %s118
      %p125 = scmp.eq.s32.totalorder %s24, 2
      %p126 = por %p124, %p125
      %p127 = scmp.ne.s32.totalorder %s118, %s119
      %p128 = scmp.eq.s32.totalorder %s24, 0
      %p129 = por %p127, %p128
      %p130 = scmp.ne.s32.totalorder %s118, %s119
      %p131 = scmp.eq.s32.totalorder %s25, 2
      %p132 = por %p130, %p131
      %p134 = scmp.ne.s32.totalorder %s119, %s133
      %p135 = scmp.eq.s32.totalorder %s25, 0
      %p136 = por %p134, %p135
      %s138 = sadd.s32 %s137, 1
      %p141 = scmp.eq.s32.totalorder %s19, 2
      %p142 = scmp.ne.s32.totalorder %s137, %s139
      %p143 = scmp.eq.s32.totalorder %s19, 0
      %p144 = por %p142, %p143
      %p145 = scmp.ne.s32.totalorder %s137, %s139
      %p146 = scmp.eq.s32.totalorder %s24, 2
      %p147 = por %p145, %p146
      %p148 = scmp.ne.s32.totalorder %s139, %s140
      %p149 = scmp.eq.s32.totalorder %s24, 0
      %p150 = por %p148, %p149
      %p151 = scmp.ne.s32.totalorder %s139, %s140
      %p152 = scmp.eq.s32.totalorder %s25, 2
      %p153 = por %p151, %p152
      %p155 = scmp.ne.s32.totalorder %s140, %s154
      %p156 = scmp.eq.s32.totalorder %s25, 0
      %p157 = por %p155, %p156
      %s159 = sadd.s32 %s158, 1
      %p162 = scmp.eq.s32.totalorder %s19, 2
      %p163 = scmp.ne.s32.totalorder %s158, %s160
      %p164 = scmp.eq.s32.totalorder %s19, 0
      %p165 = por %p163, %p164
      %p166 = scmp.ne.s32.totalorder %s158, %s160
      %p167 = scmp.eq.s32.totalorder %s24, 2
      %p168 = por %p166, %p167
      %p169 = scmp.ne.s32.totalorder %s160, %s161
      %p170 = scmp.eq.s32.totalorder %s24, 0
      %p171 = por %p169, %p170
      %p172 = scmp.ne.s32.totalorder %s160, %s161
      %p173 = scmp.eq.s32.totalorder %s25, 2
      %p174 = por %p172, %p173
      %p176 = scmp.ne.s32.totalorder %s161, %s175
      %p177 = scmp.eq.s32.totalorder %s25, 0
      %p178 = por %p176, %p177
      %s180 = sadd.s32 %s179, 1
      %p183 = scmp.eq.s32.totalorder %s19, 2
      %p184 = scmp.ne.s32.totalorder %s179, %s181
      %p185 = scmp.eq.s32.totalorder %s19, 0
      %p186 = por %p184, %p185
      %p187 = scmp.ne.s32.totalorder %s179, %s181
      %p188 = scmp.eq.s32.totalorder %s24, 2
      %p189 = por %p187, %p188
      %p190 = scmp.ne.s32.totalorder %s181, %s182
      %p191 = scmp.eq.s32.totalorder %s24, 0
      %p192 = por %p190, %p191
      %p193 = scmp.ne.s32.totalorder %s181, %s182
      %p194 = scmp.eq.s32.totalorder %s25, 2
      %p195 = por %p193, %p194
      %p197 = scmp.ne.s32.totalorder %s182, %s196
      %p198 = scmp.eq.s32.totalorder %s25, 0
      %p199 = por %p197, %p198
      %s201 = sadd.s32 %s200, 1
      %p204 = scmp.eq.s32.totalorder %s19, 2
      %p205 = scmp.ne.s32.totalorder %s200, %s202
      %p206 = scmp.eq.s32.totalorder %s19, 0
      %p207 = por %p205, %p206
      %p208 = scmp.ne.s32.totalorder %s200, %s202
      %p209 = scmp.eq.s32.totalorder %s24, 2
      %p210 = por %p208, %p209
      %p211 = scmp.ne.s32.totalorder %s202, %s203
      %p212 = scmp.eq.s32.totalorder %s24, 0
      %p213 = por %p211, %p212
      %p214 = scmp.ne.s32.totalorder %s202, %s203
      %p215 = scmp.eq.s32.totalorder %s25, 2
      %p216 = por %p214, %p215
      %p218 = scmp.ne.s32.totalorder %s203, %s217
      %p219 = scmp.eq.s32.totalorder %s25, 0
      %p220 = por %p218, %p219
      %s222 = sadd.s32 %s221, 1
      %p225 = scmp.eq.s32.totalorder %s19, 2
      %p226 = scmp.ne.s32.totalorder %s221, %s223
      %p227 = scmp.eq.s32.totalorder %s19, 0
      %p228 = por %p226, %p227
      %p229 = scmp.ne.s32.totalorder %s221, %s223
      %p230 = scmp.eq.s32.totalorder %s24, 2
      %p231 = por %p229, %p230
      %p232 = scmp.ne.s32.totalorder %s223, %s224
      %p233 = scmp.eq.s32.totalorder %s24, 0
      %p234 = por %p232, %p233
      %p235 = scmp.ne.s32.totalorder %s223, %s224
      %p236 = scmp.eq.s32.totalorder %s25, 2
      %p237 = por %p235, %p236
      %p239 = scmp.ne.s32.totalorder %s224, %s238
      %p240 = scmp.eq.s32.totalorder %s25, 0
      %p241 = por %p239, %p240
      %s243 = sadd.s32 %s242, 1
      %p246 = scmp.eq.s32.totalorder %s19, 2
      %p247 = scmp.ne.s32.totalorder %s242, %s244
      %p248 = scmp.eq.s32.totalorder %s19, 0
      %p249 = por %p247, %p248
      %p250 = scmp.ne.s32.totalorder %s242, %s244
      %p251 = scmp.eq.s32.totalorder %s24, 2
      %p252 = por %p250, %p251
      %p253 = scmp.ne.s32.totalorder %s244, %s245
      %p254 = scmp.eq.s32.totalorder %s24, 0
      %p255 = por %p253, %p254
      %p256 = scmp.ne.s32.totalorder %s244, %s245
      %p257 = scmp.eq.s32.totalorder %s25, 2
      %p258 = por %p256, %p257
      %p260 = scmp.ne.s32.totalorder %s245, %s259
      %p261 = scmp.eq.s32.totalorder %s25, 0
      %p262 = por %p260, %p261
      %s263 = ssub.s32 %s19, %s26
      %p264 = scmp.eq.s32.totalorder %s263, 0
      %s266 = sadd.s32 %s265, 1
      %s267 = scalar_select %p264, %s265, %s266
      %p270 = pneg %p264
      %p271 = scmp.eq.s32.totalorder %s19, 2
      %p272 = por %p270, %p271
      %p273 = scmp.ne.s32.totalorder %s265, %s268
      %p274 = scmp.eq.s32.totalorder %s19, 0
      %p275 = por %p273, %p274
      %p276 = scmp.ne.s32.totalorder %s265, %s268
      %p277 = scmp.eq.s32.totalorder %s24, 2
      %p278 = por %p276, %p277
      %p279 = scmp.ne.s32.totalorder %s268, %s269
      %p280 = scmp.eq.s32.totalorder %s24, 0
      %p281 = por %p279, %p280
      %p282 = scmp.ne.s32.totalorder %s268, %s269
      %p283 = scmp.eq.s32.totalorder %s25, 2
      %p284 = por %p282, %p283
      %p286 = scmp.ne.s32.totalorder %s269, %s285
      %p287 = scmp.eq.s32.totalorder %s25, 0
      %p288 = por %p286, %p287
      %p289 = scmp.le.s32.totalorder 1, %s19
      %p290 = scmp.lt.s32.totalorder %s19, 4
      %p291 = pnand %p289, %p290
      %p292 = pneg %p291
      // Predicated region
      $region9: #{tpu_custom_call.1} parent=5 // pred_check
        _
      $region10: #{tpu_custom_call.1} parent=5 // pred_check_branch
        %294 = sbr.rel (%p291) target = $region12
      $region11: #{tpu_custom_call.1} parent=5 // pred_region
        %s295 = ssub.s32 %s19, 1
        // Predicated region
        $region13: #{tpu_custom_call.1} parent=11 // pred_check
          %p296 = pneg %p66
        $region14: #{tpu_custom_call.1} parent=11 // pred_check_branch
          %298 = sbr.rel (%p296) target = $region16
        $region15: #{tpu_custom_call.1} parent=11 // pred_region
          %s300 = ssub.s32 512, 512
          %301 = vsyncadd [#allocation3], %s300
          %s302 = sshll.u32 [#allocation2], 4
          %s303 = int_to_ptr.vmem [resolvable:$true] %s302
          %308 = dma.hbm_to_vmem [thread:$0]  %s1, 512, %s303, [#allocation3], 64, 64, 4
        $region16: #{tpu_custom_call.1} parent=11 // pred_fallthru
          _
        // Predicated region
        $region17: #{tpu_custom_call.1} parent=11 // pred_check
          %p309 = pneg %p87
        $region18: #{tpu_custom_call.1} parent=11 // pred_check_branch
          %311 = sbr.rel (%p309) target = $region20
        $region19: #{tpu_custom_call.1} parent=11 // pred_region
          _
        $region20: #{tpu_custom_call.1} parent=11 // pred_fallthru
          _
        // Predicated region
        $region21: #{tpu_custom_call.1} parent=11 // pred_check
          %p312 = pneg %p108
        $region22: #{tpu_custom_call.1} parent=11 // pred_check_branch
          %314 = sbr.rel (%p312) target = $region24
        $region23: #{tpu_custom_call.1} parent=11 // pred_region
          _
        $region24: #{tpu_custom_call.1} parent=11 // pred_fallthru
          _
        // Predicated region
        $region25: #{tpu_custom_call.1} parent=11 // pred_check
          %p315 = pneg %p129
        $region26: #{tpu_custom_call.1} parent=11 // pred_check_branch
          %317 = sbr.rel (%p315) target = $region28
        $region27: #{tpu_custom_call.1} parent=11 // pred_region
          _
        $region28: #{tpu_custom_call.1} parent=11 // pred_fallthru
          _
        // Predicated region
        $region29: #{tpu_custom_call.1} parent=11 // pred_check
          %p318 = pneg %p150
        $region30: #{tpu_custom_call.1} parent=11 // pred_check_branch
          %320 = sbr.rel (%p318) target = $region32
        $region31: #{tpu_custom_call.1} parent=11 // pred_region
          %s322 = ssub.s32 1024, 1024
          %323 = vsyncadd [#allocation5], %s322
          %s324 = sshll.u32 [#allocation4], 4
          %s325 = int_to_ptr.vmem [resolvable:$true] %s324
          %330 = dma.hbm_to_vmem [thread:$0]  %s5, 1024, %s325, [#allocation5], 64, 64, 4
        $region32: #{tpu_custom_call.1} parent=11 // pred_fallthru
          _
        // Predicated region
        $region33: #{tpu_custom_call.1} parent=11 // pred_check
          %p331 = pneg %p171
        $region34: #{tpu_custom_call.1} parent=11 // pred_check_branch
          %333 = sbr.rel (%p331) target = $region36
        $region35: #{tpu_custom_call.1} parent=11 // pred_region
          _
        $region36: #{tpu_custom_call.1} parent=11 // pred_fallthru
          _
        // Predicated region
        $region37: #{tpu_custom_call.1} parent=11 // pred_check
          %p334 = pneg %p192
        $region38: #{tpu_custom_call.1} parent=11 // pred_check_branch
          %336 = sbr.rel (%p334) target = $region40
        $region39: #{tpu_custom_call.1} parent=11 // pred_region
          %s338 = ssub.s32 1024, 1024
          %339 = vsyncadd [#allocation5], %s338
          %s340 = sshll.u32 [#allocation6], 4
          %s341 = int_to_ptr.vmem [resolvable:$true] %s340
          %346 = dma.hbm_to_vmem [thread:$0]  %s7, 1024, %s341, [#allocation5], 64, 64, 4
        $region40: #{tpu_custom_call.1} parent=11 // pred_fallthru
          _
        // Predicated region
        $region41: #{tpu_custom_call.1} parent=11 // pred_check
          %p347 = pneg %p213
        $region42: #{tpu_custom_call.1} parent=11 // pred_check_branch
          %349 = sbr.rel (%p347) target = $region44
        $region43: #{tpu_custom_call.1} parent=11 // pred_region
          _
        $region44: #{tpu_custom_call.1} parent=11 // pred_fallthru
          _
        // Predicated region
        $region45: #{tpu_custom_call.1} parent=11 // pred_check
          %p350 = pneg %p234
        $region46: #{tpu_custom_call.1} parent=11 // pred_check_branch
          %352 = sbr.rel (%p350) target = $region48
        $region47: #{tpu_custom_call.1} parent=11 // pred_region
          _
        $region48: #{tpu_custom_call.1} parent=11 // pred_fallthru
          _
        // Predicated region
        $region49: #{tpu_custom_call.1} parent=11 // pred_check
          %p353 = pneg %p255
        $region50: #{tpu_custom_call.1} parent=11 // pred_check_branch
          %355 = sbr.rel (%p353) target = $region52
        $region51: #{tpu_custom_call.1} parent=11 // pred_region
          _
        $region52: #{tpu_custom_call.1} parent=11 // pred_fallthru
          _
      $region12: #{tpu_custom_call.1} parent=5 // pred_fallthru
        _
      %p356 = scmp.lt.s32.totalorder %s19, 3
      // Predicated region
      $region53: #{tpu_custom_call.1} parent=5 // pred_check
        %p357 = pneg %p356
      $region54: #{tpu_custom_call.1} parent=5 // pred_check_branch
        %359 = sbr.rel (%p357) target = $region56
      $region55: #{tpu_custom_call.1} parent=5 // pred_region
        // Predicated region
        $region57: #{tpu_custom_call.1} parent=55 // pred_check
          %p360 = pneg %p39
        $region58: #{tpu_custom_call.1} parent=55 // pred_check_branch
          %362 = sbr.rel (%p360) target = $region60
        $region59: #{tpu_custom_call.1} parent=55 // pred_region
          %p363 = scmp.lt.s32.totalorder %s19, 2
          %s364 = scalar_select %p363, %s19, 2
          %s365 = smul.addr %s364, 4
          %s366 = scalar_lea.vmem %s0, %s365
        $region60: #{tpu_custom_call.1} parent=55 // pred_fallthru
          _
      $region56: #{tpu_custom_call.1} parent=5 // pred_fallthru
        _
      %p367 = scmp.le.s32.totalorder 1, %s19
      %p368 = scmp.lt.s32.totalorder %s19, 4
      %p369 = pnand %p367, %p368
      %p370 = pneg %p369
      // Predicated region
      $region61: #{tpu_custom_call.1} parent=5 // pred_check
        _
      $region62: #{tpu_custom_call.1} parent=5 // pred_check_branch
        %372 = sbr.rel (%p369) target = $region64
      $region63: #{tpu_custom_call.1} parent=5 // pred_region
        %s373 = ssub.s32 %s19, 1
        // Predicated region
        $region65: #{tpu_custom_call.1} parent=63 // pred_check
          %p374 = pneg %p66
        $region66: #{tpu_custom_call.1} parent=63 // pred_check_branch
          %376 = sbr.rel (%p374) target = $region68
        $region67: #{tpu_custom_call.1} parent=63 // pred_region
          %377 = dma.done [#allocation3], 512
        $region68: #{tpu_custom_call.1} parent=63 // pred_fallthru
          _
        // Predicated region
        $region69: #{tpu_custom_call.1} parent=63 // pred_check
          %p378 = pneg %p150
        $region70: #{tpu_custom_call.1} parent=63 // pred_check_branch
          %380 = sbr.rel (%p378) target = $region72
        $region71: #{tpu_custom_call.1} parent=63 // pred_region
          %381 = dma.done [#allocation5], 1024
        $region72: #{tpu_custom_call.1} parent=63 // pred_fallthru
          _
        // Predicated region
        $region73: #{tpu_custom_call.1} parent=63 // pred_check
          %p382 = pneg %p192
        $region74: #{tpu_custom_call.1} parent=63 // pred_check_branch
          %384 = sbr.rel (%p382) target = $region76
        $region75: #{tpu_custom_call.1} parent=63 // pred_region
          %385 = dma.done [#allocation5], 1024
        $region76: #{tpu_custom_call.1} parent=63 // pred_fallthru
          _
        %p386 = scmp.lt.s32.totalorder %s24, 2
        %s387 = scalar_select %p386, %s24, 2
        %s388 = smul.addr %s387, 4
        %s389 = scalar_lea.vmem %s0, %s388
        %p390 = pneg %p45
        %p391 = pneg %p42
        %p392 = pneg %p66
        %p393 = pneg %p63
        %p394 = pneg %p87
        %p395 = pneg %p84
        %p396 = pneg %p108
        %p397 = pneg %p105
        %p398 = pneg %p129
        %p399 = pneg %p126
        %p400 = pneg %p150
        %p401 = pneg %p147
        %p402 = pneg %p171
        %p403 = pneg %p168
        %p404 = pneg %p192
        %p405 = pneg %p189
        %p406 = pneg %p213
        %p407 = pneg %p210
        %p408 = pneg %p234
        %p409 = pneg %p231
        %p410 = pneg %p255
        %p411 = pneg %p252
        %p412 = pneg %p281
        %p413 = pneg %p278
        %p414 = scmp.lt.s32.totalorder %s24, 2
        %s415 = scalar_select %p414, %s24, 2
        %s416 = smul.addr %s415, 8
        %s417 = scalar_lea.vmem %s11, %s416
        %p418 = scmp.lt.s32.totalorder %s24, 2
        %s419 = scalar_select %p418, %s24, 2
        %s420 = smul.addr %s419, 4
        %s421 = scalar_lea.vmem %s0, %s420
        %p422 = scmp.lt.s32.totalorder %s24, 2
        %s423 = scalar_select %p422, %s24, 2
        %s424 = smul.addr %s423, 8
        %s425 = scalar_lea.vmem %s11, %s424
        %v427 = vld [vmem:[%s421] sm:$0xf]
        %v428 = vld [vmem:[#allocation2] sm:$0xf]
        %v429 = vld [vmem:[#allocation2 + $0x4] sm:$0xf]
        %v430 = vld [vmem:[#allocation2 + $0x8] sm:$0xf]
        %v431 = vld [vmem:[#allocation2 + $0xc] sm:$0xf]
        %v432 = vld [vmem:[#allocation2 + $0x10] sm:$0xf]
        %v433 = vld [vmem:[#allocation2 + $0x14] sm:$0xf]
        %v434 = vld [vmem:[#allocation2 + $0x18] sm:$0xf]
        %v435 = vld [vmem:[#allocation2 + $0x1c] sm:$0xf]
        %v436 = vld [vmem:[%s2] sm:$0x1]
        %v438 = vlaneseq
        %v439 = vshrl.u32 %v438, 7
        %v440 = vsub.s32 0, %v439
        %v441 = vrot.slane %v436, %v440
        %v451 = vunpack.c.l.b16 %v428
        %v452 = vunpack.c.l.b16 %v429
        %v453 = vunpack.c.l.b16 %v430
        %v454 = vunpack.c.l.b16 %v431
        %v455 = vunpack.c.l.b16 %v432
        %v456 = vunpack.c.l.b16 %v433
        %v457 = vunpack.c.l.b16 %v434
        %v458 = vunpack.c.l.b16 %v435
        %v459 = vpack.c.b16 %v452, %v451
        %v460 = vpack.c.b16 %v454, %v453
        %v461 = vpack.c.b16 %v456, %v455
        %v462 = vpack.c.b16 %v458, %v457
        %vm467 = vcmask 523264
        %v469 = vsel %vm467, %v427, 0
        %471 = vmatprep.subr.bf16.mxu0 0
        %472 = vmatpush1.bf16.msra.mxu0 %v459
        %473 = vmatprep.subr.bf16.mxu0 0
        %474 = vmatpush1.bf16.msra.mxu0 %v460
        %475 = vmatprep.subr.bf16.mxu0 0
        %476 = vmatpush1.bf16.msra.mxu0 %v461
        %477 = vmatprep.subr.bf16.mxu0 0
        %478 = vmatpush1.bf16.msra.mxu0 %v462
        %479 = vmatprep.subr.bf16.mxu0 0
        %480 = vmatpush1.bf16.msra.mxu0 0
        %481 = vmatprep.subr.bf16.mxu0 0
        %482 = vmatpush1.bf16.msra.mxu0 0
        %483 = vmatprep.subr.bf16.mxu0 0
        %484 = vmatpush1.bf16.msra.mxu0 0
        %485 = vmatprep.subr.bf16.mxu0 0
        %486 = vmatpush1.bf16.msra.mxu0 0
        %487 = vmatprep.subr.bf16.mxu0 0
        %488 = vmatpush1.bf16.msra.mxu0 0
        %489 = vmatprep.subr.bf16.mxu0 0
        %490 = vmatpush1.bf16.msra.mxu0 0
        %491 = vmatprep.subr.bf16.mxu0 0
        %492 = vmatpush1.bf16.msra.mxu0 0
        %493 = vmatprep.subr.bf16.mxu0 0
        %494 = vmatpush1.bf16.msra.mxu0 0
        %495 = vmatprep.subr.bf16.mxu0 0
        %496 = vmatpush1.bf16.msra.mxu0 0
        %497 = vmatprep.subr.bf16.mxu0 0
        %498 = vmatpush1.bf16.msra.mxu0 0
        %499 = vmatprep.subr.bf16.mxu0 0
        %500 = vmatpush1.bf16.msra.mxu0 0
        %501 = vmatprep.subr.bf16.mxu0 0
        %502 = vmatpush1.bf16.msra.mxu0 0
        %503 = vmatprep.mubr.bf16.mxu0 0
        %504 = vmatmul.mubr.bf16.gmra.mrb[0].mxu0 %v469
        %v505 = vpop.f32.mrb[0].mxu0
        %v506 = vadd.f32 %v441, %v505
        %v507 = vpop.f32.mrb[0].mxu0
        %v508 = vpop.f32.mrb[0].mxu0
        %v509 = vpop.f32.mrb[0].mxu0
        %510 = vdwg.mxu0
        %v511 = vmax.f32 %v506, 0.0
        %v512 = vpack.c.bf16 %v511, %v511
        %v513 = vld [vmem:[%s3] sm:$0xf]
        %v514 = vld [vmem:[%s3 + $0x4] sm:$0xf]
        %v515 = vld [vmem:[%s3 + $0x8] sm:$0xf]
        %v516 = vld [vmem:[%s3 + $0xc] sm:$0xf]
        %v517 = vld [vmem:[%s3 + $0x10] sm:$0xf]
        %v518 = vld [vmem:[%s3 + $0x14] sm:$0xf]
        %v519 = vld [vmem:[%s3 + $0x18] sm:$0xf]
        %v520 = vld [vmem:[%s3 + $0x1c] sm:$0xf]
        %v521 = vld [vmem:[%s3 + $0x20] sm:$0xf]
        %v522 = vld [vmem:[%s3 + $0x24] sm:$0xf]
        %v523 = vld [vmem:[%s3 + $0x28] sm:$0xf]
        %v524 = vld [vmem:[%s3 + $0x2c] sm:$0xf]
        %v525 = vld [vmem:[%s3 + $0x30] sm:$0xf]
        %v526 = vld [vmem:[%s3 + $0x34] sm:$0xf]
        %v527 = vld [vmem:[%s3 + $0x38] sm:$0xf]
        %v528 = vld [vmem:[%s3 + $0x3c] sm:$0xf]
        %v529 = vld [vmem:[%s4] sm:$0x1]
        %v531 = vlaneseq
        %v532 = vshrl.u32 %v531, 7
        %v533 = vsub.s32 0, %v532
        %v534 = vrot.slane %v529, %v533
        %v552 = vunpack.c.l.b16 %v513
        %v553 = vunpack.c.l.b16 %v514
        %v554 = vunpack.c.l.b16 %v515
        %v555 = vunpack.c.l.b16 %v516
        %v556 = vunpack.c.l.b16 %v517
        %v557 = vunpack.c.l.b16 %v518
        %v558 = vunpack.c.l.b16 %v519
        %v559 = vunpack.c.l.b16 %v520
        %v560 = vunpack.c.l.b16 %v521
        %v561 = vunpack.c.l.b16 %v522
        %v562 = vunpack.c.l.b16 %v523
        %v563 = vunpack.c.l.b16 %v524
        %v564 = vunpack.c.l.b16 %v525
        %v565 = vunpack.c.l.b16 %v526
        %v566 = vunpack.c.l.b16 %v527
        %v567 = vunpack.c.l.b16 %v528
        %v568 = vpack.c.b16 %v553, %v552
        %v569 = vpack.c.b16 %v555, %v554
        %v570 = vpack.c.b16 %v557, %v556
        %v571 = vpack.c.b16 %v559, %v558
        %v572 = vpack.c.b16 %v561, %v560
        %v573 = vpack.c.b16 %v563, %v562
        %v574 = vpack.c.b16 %v565, %v564
        %v575 = vpack.c.b16 %v567, %v566
        %584 = vmatprep.subr.bf16.mxu0 0
        %585 = vmatpush1.bf16.msra.mxu0 %v568
        %586 = vmatprep.subr.bf16.mxu0 0
        %587 = vmatpush1.bf16.msra.mxu0 %v569
        %588 = vmatprep.subr.bf16.mxu0 0
        %589 = vmatpush1.bf16.msra.mxu0 %v570
        %590 = vmatprep.subr.bf16.mxu0 0
        %591 = vmatpush1.bf16.msra.mxu0 %v571
        %592 = vmatprep.subr.bf16.mxu0 0
        %593 = vmatpush1.bf16.msra.mxu0 %v572
        %594 = vmatprep.subr.bf16.mxu0 0
        %595 = vmatpush1.bf16.msra.mxu0 %v573
        %596 = vmatprep.subr.bf16.mxu0 0
        %597 = vmatpush1.bf16.msra.mxu0 %v574
        %598 = vmatprep.subr.bf16.mxu0 0
        %599 = vmatpush1.bf16.msra.mxu0 %v575
        %600 = vmatprep.subr.bf16.mxu0 0
        %601 = vmatpush1.bf16.msra.mxu0 0
        %602 = vmatprep.subr.bf16.mxu0 0
        %603 = vmatpush1.bf16.msra.mxu0 0
        %604 = vmatprep.subr.bf16.mxu0 0
        %605 = vmatpush1.bf16.msra.mxu0 0
        %606 = vmatprep.subr.bf16.mxu0 0
        %607 = vmatpush1.bf16.msra.mxu0 0
        %608 = vmatprep.subr.bf16.mxu0 0
        %609 = vmatpush1.bf16.msra.mxu0 0
        %610 = vmatprep.subr.bf16.mxu0 0
        %611 = vmatpush1.bf16.msra.mxu0 0
        %612 = vmatprep.subr.bf16.mxu0 0
        %613 = vmatpush1.bf16.msra.mxu0 0
        %614 = vmatprep.subr.bf16.mxu0 0
        %615 = vmatpush1.bf16.msra.mxu0 0
        %616 = vmatprep.mubr.bf16.mxu0 0
        %617 = vmatmul.mubr.bf16.gmra.mrb[0].mxu0 %v512
        %v618 = vpop.f32.mrb[0].mxu0
        %v619 = vadd.f32 %v534, %v618
        %v620 = vpop.f32.mrb[0].mxu0
        %v621 = vpop.f32.mrb[0].mxu0
        %v622 = vpop.f32.mrb[0].mxu0
        %623 = vdwg.mxu0
        %v624 = vmax.f32 %v619, 0.0
        %v625 = vpack.c.bf16 %v624, %v624
        %v626 = vld [vmem:[#allocation4] sm:$0xf]
        %v627 = vld [vmem:[#allocation4 + $0x4] sm:$0xf]
        %v628 = vld [vmem:[#allocation4 + $0x8] sm:$0xf]
        %v629 = vld [vmem:[#allocation4 + $0xc] sm:$0xf]
        %v630 = vld [vmem:[#allocation4 + $0x10] sm:$0xf]
        %v631 = vld [vmem:[#allocation4 + $0x14] sm:$0xf]
        %v632 = vld [vmem:[#allocation4 + $0x18] sm:$0xf]
        %v633 = vld [vmem:[#allocation4 + $0x1c] sm:$0xf]
        %v634 = vld [vmem:[#allocation4 + $0x20] sm:$0xf]
        %v635 = vld [vmem:[#allocation4 + $0x24] sm:$0xf]
        %v636 = vld [vmem:[#allocation4 + $0x28] sm:$0xf]
        %v637 = vld [vmem:[#allocation4 + $0x2c] sm:$0xf]
        %v638 = vld [vmem:[#allocation4 + $0x30] sm:$0xf]
        %v639 = vld [vmem:[#allocation4 + $0x34] sm:$0xf]
        %v640 = vld [vmem:[#allocation4 + $0x38] sm:$0xf]
        %v641 = vld [vmem:[#allocation4 + $0x3c] sm:$0xf]
        %v642 = vld [vmem:[%s6] sm:$0x1]
        %v644 = vlaneseq
        %v645 = vshrl.u32 %v644, 7
        %v646 = vsub.s32 0, %v645
        %v647 = vrot.slane %v642, %v646
        %v665 = vunpack.c.l.b16 %v626
        %v666 = vunpack.c.l.b16 %v627
        %v667 = vunpack.c.l.b16 %v628
        %v668 = vunpack.c.l.b16 %v629
        %v669 = vunpack.c.l.b16 %v630
        %v670 = vunpack.c.l.b16 %v631
        %v671 = vunpack.c.l.b16 %v632
        %v672 = vunpack.c.l.b16 %v633
        %v673 = vunpack.c.l.b16 %v634
        %v674 = vunpack.c.l.b16 %v635
        %v675 = vunpack.c.l.b16 %v636
        %v676 = vunpack.c.l.b16 %v637
        %v677 = vunpack.c.l.b16 %v638
        %v678 = vunpack.c.l.b16 %v639
        %v679 = vunpack.c.l.b16 %v640
        %v680 = vunpack.c.l.b16 %v641
        %v681 = vpack.c.b16 %v666, %v665
        %v682 = vpack.c.b16 %v668, %v667
        %v683 = vpack.c.b16 %v670, %v669
        %v684 = vpack.c.b16 %v672, %v671
        %v685 = vpack.c.b16 %v674, %v673
        %v686 = vpack.c.b16 %v676, %v675
        %v687 = vpack.c.b16 %v678, %v677
        %v688 = vpack.c.b16 %v680, %v679
        %697 = vmatprep.subr.bf16.mxu0 0
        %698 = vmatpush1.bf16.msra.mxu0 %v681
        %699 = vmatprep.subr.bf16.mxu0 0
        %700 = vmatpush1.bf16.msra.mxu0 %v682
        %701 = vmatprep.subr.bf16.mxu0 0
        %702 = vmatpush1.bf16.msra.mxu0 %v683
        %703 = vmatprep.subr.bf16.mxu0 0
        %704 = vmatpush1.bf16.msra.mxu0 %v684
        %705 = vmatprep.subr.bf16.mxu0 0
        %706 = vmatpush1.bf16.msra.mxu0 %v685
        %707 = vmatprep.subr.bf16.mxu0 0
        %708 = vmatpush1.bf16.msra.mxu0 %v686
        %709 = vmatprep.subr.bf16.mxu0 0
        %710 = vmatpush1.bf16.msra.mxu0 %v687
        %711 = vmatprep.subr.bf16.mxu0 0
        %712 = vmatpush1.bf16.msra.mxu0 %v688
        %713 = vmatprep.subr.bf16.mxu0 0
        %714 = vmatpush1.bf16.msra.mxu0 0
        %715 = vmatprep.subr.bf16.mxu0 0
        %716 = vmatpush1.bf16.msra.mxu0 0
        %717 = vmatprep.subr.bf16.mxu0 0
        %718 = vmatpush1.bf16.msra.mxu0 0
        %719 = vmatprep.subr.bf16.mxu0 0
        %720 = vmatpush1.bf16.msra.mxu0 0
        %721 = vmatprep.subr.bf16.mxu0 0
        %722 = vmatpush1.bf16.msra.mxu0 0
        %723 = vmatprep.subr.bf16.mxu0 0
        %724 = vmatpush1.bf16.msra.mxu0 0
        %725 = vmatprep.subr.bf16.mxu0 0
        %726 = vmatpush1.bf16.msra.mxu0 0
        %727 = vmatprep.subr.bf16.mxu0 0
        %728 = vmatpush1.bf16.msra.mxu0 0
        %729 = vmatprep.mubr.bf16.mxu0 0
        %730 = vmatmul.mubr.bf16.gmra.mrb[0].mxu0 %v625
        %v731 = vpop.f32.mrb[0].mxu0
        %v732 = vadd.f32 %v647, %v731
        %v733 = vpop.f32.mrb[0].mxu0
        %v734 = vpop.f32.mrb[0].mxu0
        %v735 = vpop.f32.mrb[0].mxu0
        %736 = vdwg.mxu0
        %v737 = vmax.f32 %v732, 0.0
        %v738 = vpack.c.bf16 %v737, %v737
        %v739 = vld [vmem:[#allocation6] sm:$0xf]
        %v740 = vld [vmem:[#allocation6 + $0x4] sm:$0xf]
        %v741 = vld [vmem:[#allocation6 + $0x8] sm:$0xf]
        %v742 = vld [vmem:[#allocation6 + $0xc] sm:$0xf]
        %v743 = vld [vmem:[#allocation6 + $0x10] sm:$0xf]
        %v744 = vld [vmem:[#allocation6 + $0x14] sm:$0xf]
        %v745 = vld [vmem:[#allocation6 + $0x18] sm:$0xf]
        %v746 = vld [vmem:[#allocation6 + $0x1c] sm:$0xf]
        %v747 = vld [vmem:[#allocation6 + $0x20] sm:$0xf]
        %v748 = vld [vmem:[#allocation6 + $0x24] sm:$0xf]
        %v749 = vld [vmem:[#allocation6 + $0x28] sm:$0xf]
        %v750 = vld [vmem:[#allocation6 + $0x2c] sm:$0xf]
        %v751 = vld [vmem:[#allocation6 + $0x30] sm:$0xf]
        %v752 = vld [vmem:[#allocation6 + $0x34] sm:$0xf]
        %v753 = vld [vmem:[#allocation6 + $0x38] sm:$0xf]
        %v754 = vld [vmem:[#allocation6 + $0x3c] sm:$0xf]
        %v755 = vld [vmem:[%s8] sm:$0x1]
        %v757 = vlaneseq
        %v758 = vshrl.u32 %v757, 7
        %v759 = vsub.s32 0, %v758
        %v760 = vrot.slane %v755, %v759
        %v778 = vunpack.c.l.b16 %v739
        %v779 = vunpack.c.l.b16 %v740
        %v780 = vunpack.c.l.b16 %v741
        %v781 = vunpack.c.l.b16 %v742
        %v782 = vunpack.c.l.b16 %v743
        %v783 = vunpack.c.l.b16 %v744
        %v784 = vunpack.c.l.b16 %v745
        %v785 = vunpack.c.l.b16 %v746
        %v786 = vunpack.c.l.b16 %v747
        %v787 = vunpack.c.l.b16 %v748
        %v788 = vunpack.c.l.b16 %v749
        %v789 = vunpack.c.l.b16 %v750
        %v790 = vunpack.c.l.b16 %v751
        %v791 = vunpack.c.l.b16 %v752
        %v792 = vunpack.c.l.b16 %v753
        %v793 = vunpack.c.l.b16 %v754
        %v794 = vpack.c.b16 %v779, %v778
        %v795 = vpack.c.b16 %v781, %v780
        %v796 = vpack.c.b16 %v783, %v782
        %v797 = vpack.c.b16 %v785, %v784
        %v798 = vpack.c.b16 %v787, %v786
        %v799 = vpack.c.b16 %v789, %v788
        %v800 = vpack.c.b16 %v791, %v790
        %v801 = vpack.c.b16 %v793, %v792
        %810 = vmatprep.subr.bf16.mxu0 0
        %811 = vmatpush1.bf16.msra.mxu0 %v794
        %812 = vmatprep.subr.bf16.mxu0 0
        %813 = vmatpush1.bf16.msra.mxu0 %v795
        %814 = vmatprep.subr.bf16.mxu0 0
        %815 = vmatpush1.bf16.msra.mxu0 %v796
        %816 = vmatprep.subr.bf16.mxu0 0
        %817 = vmatpush1.bf16.msra.mxu0 %v797
        %818 = vmatprep.subr.bf16.mxu0 0
        %819 = vmatpush1.bf16.msra.mxu0 %v798
        %820 = vmatprep.subr.bf16.mxu0 0
        %821 = vmatpush1.bf16.msra.mxu0 %v799
        %822 = vmatprep.subr.bf16.mxu0 0
        %823 = vmatpush1.bf16.msra.mxu0 %v800
        %824 = vmatprep.subr.bf16.mxu0 0
        %825 = vmatpush1.bf16.msra.mxu0 %v801
        %826 = vmatprep.subr.bf16.mxu0 0
        %827 = vmatpush1.bf16.msra.mxu0 0
        %828 = vmatprep.subr.bf16.mxu0 0
        %829 = vmatpush1.bf16.msra.mxu0 0
        %830 = vmatprep.subr.bf16.mxu0 0
        %831 = vmatpush1.bf16.msra.mxu0 0
        %832 = vmatprep.subr.bf16.mxu0 0
        %833 = vmatpush1.bf16.msra.mxu0 0
        %834 = vmatprep.subr.bf16.mxu0 0
        %835 = vmatpush1.bf16.msra.mxu0 0
        %836 = vmatprep.subr.bf16.mxu0 0
        %837 = vmatpush1.bf16.msra.mxu0 0
        %838 = vmatprep.subr.bf16.mxu0 0
        %839 = vmatpush1.bf16.msra.mxu0 0
        %840 = vmatprep.subr.bf16.mxu0 0
        %841 = vmatpush1.bf16.msra.mxu0 0
        %842 = vmatprep.mubr.bf16.mxu0 0
        %843 = vmatmul.mubr.bf16.gmra.mrb[0].mxu0 %v738
        %v844 = vpop.f32.mrb[0].mxu0
        %v845 = vadd.f32 %v760, %v844
        %v846 = vpop.f32.mrb[0].mxu0
        %v847 = vpop.f32.mrb[0].mxu0
        %v848 = vpop.f32.mrb[0].mxu0
        %849 = vdwg.mxu0
        %v850 = vmax.f32 %v845, 0.0
        %v851 = vpack.c.bf16 %v850, %v850
        %v852 = vld [vmem:[%s9] sm:$0xf]
        %v853 = vld [vmem:[%s9 + $0x4] sm:$0xf]
        %v854 = vld [vmem:[%s9 + $0x8] sm:$0xf]
        %v855 = vld [vmem:[%s9 + $0xc] sm:$0xf]
        %v856 = vld [vmem:[%s9 + $0x10] sm:$0xf]
        %v857 = vld [vmem:[%s9 + $0x14] sm:$0xf]
        %v858 = vld [vmem:[%s9 + $0x18] sm:$0xf]
        %v859 = vld [vmem:[%s9 + $0x1c] sm:$0xf]
        %v860 = vld [vmem:[%s9 + $0x20] sm:$0xf]
        %v861 = vld [vmem:[%s9 + $0x24] sm:$0xf]
        %v862 = vld [vmem:[%s9 + $0x28] sm:$0xf]
        %v863 = vld [vmem:[%s9 + $0x2c] sm:$0xf]
        %v864 = vld [vmem:[%s9 + $0x30] sm:$0xf]
        %v865 = vld [vmem:[%s9 + $0x34] sm:$0xf]
        %v866 = vld [vmem:[%s9 + $0x38] sm:$0xf]
        %v867 = vld [vmem:[%s9 + $0x3c] sm:$0xf]
        %v868 = vld [vmem:[%s10] sm:$0x1]
        %v870 = vlaneseq
        %v871 = vshrl.u32 %v870, 7
        %v872 = vsub.s32 0, %v871
        %v873 = vrot.slane %v868, %v872
        %v891 = vunpack.c.l.b16 %v852
        %v892 = vunpack.c.l.b16 %v853
        %v893 = vunpack.c.l.b16 %v854
        %v894 = vunpack.c.l.b16 %v855
        %v895 = vunpack.c.l.b16 %v856
        %v896 = vunpack.c.l.b16 %v857
        %v897 = vunpack.c.l.b16 %v858
        %v898 = vunpack.c.l.b16 %v859
        %v899 = vunpack.c.l.b16 %v860
        %v900 = vunpack.c.l.b16 %v861
        %v901 = vunpack.c.l.b16 %v862
        %v902 = vunpack.c.l.b16 %v863
        %v903 = vunpack.c.l.b16 %v864
        %v904 = vunpack.c.l.b16 %v865
        %v905 = vunpack.c.l.b16 %v866
        %v906 = vunpack.c.l.b16 %v867
        %v907 = vpack.c.b16 %v892, %v891
        %v908 = vpack.c.b16 %v894, %v893
        %v909 = vpack.c.b16 %v896, %v895
        %v910 = vpack.c.b16 %v898, %v897
        %v911 = vpack.c.b16 %v900, %v899
        %v912 = vpack.c.b16 %v902, %v901
        %v913 = vpack.c.b16 %v904, %v903
        %v914 = vpack.c.b16 %v906, %v905
        %923 = vmatprep.subr.bf16.mxu0 0
        %924 = vmatpush1.bf16.msra.mxu0 %v907
        %925 = vmatprep.subr.bf16.mxu0 0
        %926 = vmatpush1.bf16.msra.mxu0 %v908
        %927 = vmatprep.subr.bf16.mxu0 0
        %928 = vmatpush1.bf16.msra.mxu0 %v909
        %929 = vmatprep.subr.bf16.mxu0 0
        %930 = vmatpush1.bf16.msra.mxu0 %v910
        %931 = vmatprep.subr.bf16.mxu0 0
        %932 = vmatpush1.bf16.msra.mxu0 %v911
        %933 = vmatprep.subr.bf16.mxu0 0
        %934 = vmatpush1.bf16.msra.mxu0 %v912
        %935 = vmatprep.subr.bf16.mxu0 0
        %936 = vmatpush1.bf16.msra.mxu0 %v913
        %937 = vmatprep.subr.bf16.mxu0 0
        %938 = vmatpush1.bf16.msra.mxu0 %v914
        %939 = vmatprep.subr.bf16.mxu0 0
        %940 = vmatpush1.bf16.msra.mxu0 0
        %941 = vmatprep.subr.bf16.mxu0 0
        %942 = vmatpush1.bf16.msra.mxu0 0
        %943 = vmatprep.subr.bf16.mxu0 0
        %944 = vmatpush1.bf16.msra.mxu0 0
        %945 = vmatprep.subr.bf16.mxu0 0
        %946 = vmatpush1.bf16.msra.mxu0 0
        %947 = vmatprep.subr.bf16.mxu0 0
        %948 = vmatpush1.bf16.msra.mxu0 0
        %949 = vmatprep.subr.bf16.mxu0 0
        %950 = vmatpush1.bf16.msra.mxu0 0
        %951 = vmatprep.subr.bf16.mxu0 0
        %952 = vmatpush1.bf16.msra.mxu0 0
        %953 = vmatprep.subr.bf16.mxu0 0
        %954 = vmatpush1.bf16.msra.mxu0 0
        %955 = vmatprep.mubr.bf16.mxu0 0
        %956 = vmatmul.mubr.bf16.gmra.mrb[0].mxu0 %v851
        %v957 = vpop.f32.mrb[0].mxu0
        %v958 = vadd.f32 %v873, %v957
        %v959 = vpop.f32.mrb[0].mxu0
        %v960 = vpop.f32.mrb[0].mxu0
        %v961 = vpop.f32.mrb[0].mxu0
        %962 = vdwg.mxu0
        %vm963 = vcmask 72704
        %964 = vst.msk [vmem:[%s425] sm:$0xff] %vm963, %v958
        %p965 = scmp.lt.s32.totalorder %s24, 2
        %s966 = scalar_select %p965, %s24, 2
        %s967 = smul.addr %s966, 8
        %s968 = scalar_lea.vmem %s11, %s967
        // Predicated region
        $region77: #{tpu_custom_call.1} parent=63 // pred_check
          %p969 = pneg %p278
        $region78: #{tpu_custom_call.1} parent=63 // pred_check_branch
          %971 = sbr.rel (%p969) target = $region80
        $region79: #{tpu_custom_call.1} parent=63 // pred_region
          _
        $region80: #{tpu_custom_call.1} parent=63 // pred_fallthru
          _
      $region64: #{tpu_custom_call.1} parent=5 // pred_fallthru
        _
      %p972 = scmp.le.s32.totalorder 2, %s19
      // Predicated region
      $region81: #{tpu_custom_call.1} parent=5 // pred_check
        %p973 = pneg %p972
      $region82: #{tpu_custom_call.1} parent=5 // pred_check_branch
        %975 = sbr.rel (%p973) target = $region84
      $region83: #{tpu_custom_call.1} parent=5 // pred_region
        %s976 = ssub.s32 %s19, 2
        // Predicated region
        $region85: #{tpu_custom_call.1} parent=83 // pred_check
          %p977 = pneg %p284
        $region86: #{tpu_custom_call.1} parent=83 // pred_check_branch
          %979 = sbr.rel (%p977) target = $region88
        $region87: #{tpu_custom_call.1} parent=83 // pred_region
          %p980 = scmp.lt.s32.totalorder %s25, 2
          %s981 = scalar_select %p980, %s25, 2
          %s982 = smul.addr %s981, 8
          %s983 = scalar_lea.vmem %s11, %s982
        $region88: #{tpu_custom_call.1} parent=83 // pred_fallthru
          _
      $region84: #{tpu_custom_call.1} parent=5 // pred_fallthru
        _
    $region6: #{tpu_custom_call.1} parent=1 // loop_footer
      %s23 = sadd.s32 1, %s19
    $region7: #{tpu_custom_call.1} parent=1 // loop_footer_branch
      %18 = sbr.rel target = $region3
    $region8: #{tpu_custom_call.1} parent=1 // loop_exit
      _
    %984 = vsyncpa [#allocation3], 1
    %s985 = scalar_lea.sflag [#allocation3], 1
    %986 = vsyncpa %s985, 1
    %987 = vsyncpa [#allocation5], 1

</llo_original>
